<compile_context>
chip_gen: v7x
topology: tpu7x:2x2x1
jax: 0.10.0
libtpu: 0.0.40
codegen_flags: <defaults>
</compile_context>

<pallas_src>
import functools

import jax
import jax.numpy as jnp
from jax.experimental import pallas as pl
from jax.experimental.pallas import tpu as pltpu

NEG_SLOPE = 0.01   # nn.LeakyReLU default
BN_EPS = 1e-5      # nn.BatchNorm1d default

# Preferred tile sizes (clamped per dimension below).  256/256/512 fills the
# 2x256x256 MXU on v6e/v7x and keeps the double-buffered working set at ~2-3 MiB.
TILE_N = 256
TILE_D = 256
TILE_K = 512


def _leaky_relu(z):
    return jnp.where(z >= 0, z, NEG_SLOPE * z)


@functools.lru_cache(maxsize=None)
def _vmem_limit_bytes():
    """Generation-aware VMEM request: ~75% of physical capacity so the compiler
    keeps headroom for double buffers / internal scratch (48 MiB on v7x,
    ~96 MiB on v5e/v6e)."""
    cap = 0
    try:
        cap = int(getattr(pltpu.get_tpu_info(), "vmem_capacity_bytes", 0))
    except Exception:
        cap = 0
    if cap <= 0:
        cap = 64 * 1024 * 1024
    return int(cap * 3 // 4)


def _pick_tile(dim, pref, align):
    """Largest tile <= pref that divides dim and is a multiple of `align`;
    falls back to the full dim (always a legal block)."""
    if dim <= pref:
        return dim
    t = (pref // align) * align
    while t >= align:
        if dim % t == 0:
            return t
        t -= align
    return dim


def _pick_parallel_tile(dim, pref, align):
    """Like _pick_tile but prefers >= 2 tiles so both v7x TensorCores get work."""
    t = _pick_tile(dim, pref, align)
    if dim // t < 2 and dim >= 2 * align:
        t2 = _pick_tile(dim, dim // 2, align)
        if dim % t2 == 0 and dim // t2 >= 2:
            t = t2
    return t


# ----------------------------------------------------------------------------
# Kernel 1a: fused chain of eval-mode encoder stages.
#   For each prior level: (x @ W) * scale + shift -> LeakyReLU, intermediates
#   stay in VMEM (bf16 between levels).  Emits x_pre in f32 (module return) and
#   in bf16 (feeds the train stage without an extra cast pass / f32 reload).
# ----------------------------------------------------------------------------
def _enc_eval_chain_kernel(*refs, num_levels):
    x_ref = refs[0]
    o32_ref = refs[1 + 3 * num_levels]
    o16_ref = refs[2 + 3 * num_levels]
    act16 = x_ref[...].astype(jnp.bfloat16)
    act32 = None
    for l in range(num_levels):
        w_ref, sc_ref, sh_ref = refs[1 + 3 * l: 4 + 3 * l]
        z = jnp.dot(act16, w_ref[...], preferred_element_type=jnp.float32)
        act32 = _leaky_relu(z * sc_ref[...] + sh_ref[...])
        act16 = act32.astype(jnp.bfloat16)
    o32_ref[...] = act32
    o16_ref[...] = act16


def encoder_chain_eval(x, weights, scales, shifts):
    n, din0 = x.shape
    num_levels = len(weights)
    d_last = weights[-1].shape[1]
    tn = _pick_parallel_tile(n, TILE_N, 8)
    grid = (n // tn,)

    in_specs = [pl.BlockSpec((tn, din0), lambda i: (i, 0))]
    operands = [x]
    for w, sc, sh in zip(weights, scales, shifts):
        dout = w.shape[1]
        in_specs.append(pl.BlockSpec(w.shape, lambda i: (0, 0)))       # full weight (bf16, VMEM-resident)
        in_specs.append(pl.BlockSpec((1, dout), lambda i: (0, 0)))     # folded scale
        in_specs.append(pl.BlockSpec((1, dout), lambda i: (0, 0)))     # folded shift
        operands += [w, sc, sh]

    kernel = functools.partial(_enc_eval_chain_kernel, num_levels=num_levels)
    return pl.pallas_call(
        kernel,
        out_shape=(jax.ShapeDtypeStruct((n, d_last), jnp.float32),
                   jax.ShapeDtypeStruct((n, d_last), jnp.bfloat16)),
        grid_spec=pltpu.PrefetchScalarGridSpec(
            num_scalar_prefetch=0,
            grid=grid,
            in_specs=in_specs,
            out_specs=[pl.BlockSpec((tn, d_last), lambda i: (i, 0)),
                       pl.BlockSpec((tn, d_last), lambda i: (i, 0))],
        ),
        compiler_params=pltpu.CompilerParams(
            dimension_semantics=("parallel",),
            vmem_limit_bytes=_vmem_limit_bytes()),
    )(*operands)


def _chain_fits_vmem(x, weights):
    """Rough budget check for keeping all prior-level weights VMEM-resident."""
    w_bytes = sum(int(w.size) * w.dtype.itemsize for w in weights)
    widest = max([int(x.shape[1])] + [int(w.shape[1]) for w in weights])
    act_bytes = 8 * TILE_N * widest * 4   # per-N-tile temporaries + double buffers
    return w_bytes + act_bytes <= _vmem_limit_bytes() // 2


# ----------------------------------------------------------------------------
# Kernel 1b: per-layer eval-mode encoder stage (fallback for very wide layers).
#   Fused (x @ W) * scale + shift -> LeakyReLU with K-tiled f32 accumulation.
# ----------------------------------------------------------------------------
def _enc_eval_kernel(x_ref, w_ref, scale_ref, shift_ref, o_ref, acc_ref):
    k = pl.program_id(2)

    @pl.when(k == 0)
    def _():
        acc_ref[...] = jnp.zeros_like(acc_ref)

    acc_ref[...] += jnp.dot(x_ref[...].astype(jnp.bfloat16), w_ref[...],
                            preferred_element_type=jnp.float32)

    @pl.when(k == pl.num_programs(2) - 1)
    def _():
        z = acc_ref[...] * scale_ref[...] + shift_ref[...]
        o_ref[...] = _leaky_relu(z).astype(o_ref.dtype)


def encoder_layer_eval(x, w_bf16, scale, shift, out_dtype):
    n, din = x.shape
    dout = w_bf16.shape[1]
    tn = _pick_parallel_tile(n, TILE_N, 8)
    td = _pick_tile(dout, TILE_D, 128)
    tk = _pick_tile(din, TILE_K, 128)
    grid = (n // tn, dout // td, din // tk)
    return pl.pallas_call(
        _enc_eval_kernel,
        out_shape=jax.ShapeDtypeStruct((n, dout), out_dtype),
        grid_spec=pltpu.PrefetchScalarGridSpec(
            num_scalar_prefetch=0,
            grid=grid,
            in_specs=[
                pl.BlockSpec((tn, tk), lambda i, j, k: (i, k)),   # x
                pl.BlockSpec((tk, td), lambda i, j, k: (k, j)),   # W (bf16)
                pl.BlockSpec((1, td), lambda i, j, k: (0, j)),    # folded scale
                pl.BlockSpec((1, td), lambda i, j, k: (0, j)),    # folded shift
            ],
            out_specs=pl.BlockSpec((tn, td), lambda i, j, k: (i, j)),
            scratch_shapes=[pltpu.VMEM((tn, td), jnp.float32)],
        ),
        compiler_params=pltpu.CompilerParams(
            dimension_semantics=("parallel", "parallel", "arbitrary"),
            vmem_limit_bytes=_vmem_limit_bytes()),
    )(x, w_bf16, scale, shift)


# ----------------------------------------------------------------------------
# Kernel 2: train-mode encoder Linear + per-N-tile batch-statistics partials.
#   y = x @ W + b (bf16 output, f32 accumulation), plus per-(N tile) column
#   sum / sum-of-squares computed from the f32 accumulator.  Both N and Dout
#   are "parallel" (v7x megacore friendly); the tiny cross-tile reduction that
#   turns partials into BN (scale, shift) happens in XLA outside the kernel.
# ----------------------------------------------------------------------------
def _enc_train_kernel(x_ref, w_ref, b_ref, y_ref, psum_ref, pssq_ref, acc_ref):
    k = pl.program_id(2)

    @pl.when(k == 0)
    def _():
        acc_ref[...] = jnp.zeros_like(acc_ref)

    acc_ref[...] += jnp.dot(x_ref[...].astype(jnp.bfloat16), w_ref[...],
                            preferred_element_type=jnp.float32)

    @pl.when(k == pl.num_programs(2) - 1)
    def _():
        y = acc_ref[...] + b_ref[...]                 # f32
        y_ref[...] = y.astype(y_ref.dtype)            # bf16 HBM round trip
        col_sum = jnp.sum(y, axis=0, keepdims=True)   # stats from f32 accumulator
        col_ssq = jnp.sum(y * y, axis=0, keepdims=True)
        psum_ref[...] = col_sum.reshape(psum_ref.shape)
        pssq_ref[...] = col_ssq.reshape(pssq_ref.shape)


def encoder_layer_train(x, w_bf16, b, gamma, beta):
    n, din = x.shape
    dout = w_bf16.shape[1]
    tn = _pick_parallel_tile(n, TILE_N, 8)
    td = _pick_tile(dout, TILE_D, 128)
    tk = _pick_tile(din, TILE_K, 128)
    ni = n // tn
    grid = (ni, dout // td, din // tk)

    y, psum, pssq = pl.pallas_call(
        _enc_train_kernel,
        out_shape=(jax.ShapeDtypeStruct((n, dout), jnp.bfloat16),     # y = x@W + b
                   jax.ShapeDtypeStruct((ni, 1, dout), jnp.float32),  # partial col sums
                   jax.ShapeDtypeStruct((ni, 1, dout), jnp.float32)), # partial col sum-sq
        grid_spec=pltpu.PrefetchScalarGridSpec(
            num_scalar_prefetch=0,
            grid=grid,
            in_specs=[
                pl.BlockSpec((tn, tk), lambda i, j, k: (i, k)),    # x (f32 or bf16)
                pl.BlockSpec((tk, td), lambda i, j, k: (k, j)),    # W (bf16)
                pl.BlockSpec((1, td), lambda i, j, k: (0, j)),     # bias
            ],
            out_specs=[
                pl.BlockSpec((tn, td), lambda i, j, k: (i, j)),
                pl.BlockSpec((1, 1, td), lambda i, j, k: (i, 0, j)),
                pl.BlockSpec((1, 1, td), lambda i, j, k: (i, 0, j)),
            ],
            scratch_shapes=[pltpu.VMEM((tn, td), jnp.float32)],
        ),
        compiler_params=pltpu.CompilerParams(
            dimension_semantics=("parallel", "parallel", "arbitrary"),
            vmem_limit_bytes=_vmem_limit_bytes()),
    )(x, w_bf16, b)

    # Finalize BN batch statistics from the partials (tiny XLA op).
    s = jnp.sum(psum, axis=0)            # (1, dout)
    ss = jnp.sum(pssq, axis=0)
    mean = s / n
    # Biased variance, single pass (matches PyTorch train-mode normalization and
    # the reference below; fine at these activation scales).
    var = ss / n - mean * mean
    scale = gamma * jax.lax.rsqrt(var + BN_EPS)
    shift = beta - mean * scale
    return y, scale, shift


# ----------------------------------------------------------------------------
# Kernel 3: fused BN-normalize + LeakyReLU + tiled decoder Linear.
#   grid = (N tiles, Ddec tiles, h/K tiles).  reconstruct accumulates directly
#   into its f32 output block (resident across K, no scratch).  embed's block
#   index is (i, k) and is rewritten each step so every writeback is valid
#   (redundant only when Ddec has >1 tile).
# ----------------------------------------------------------------------------
def _bn_act_dec_kernel(y_ref, scale_ref, shift_ref, wd_ref, bd_ref, e_ref, r_ref):
    k = pl.program_id(2)

    z = y_ref[...].astype(jnp.float32) * scale_ref[...] + shift_ref[...]
    e = _leaky_relu(z)
    e_ref[...] = e                       # f32 module return
    e16 = e.astype(jnp.bfloat16)         # single cast, reused for the MXU feed

    @pl.when(k == 0)
    def _():
        r_ref[...] = jnp.zeros(r_ref.shape, r_ref.dtype)

    r_ref[...] += jnp.dot(e16, wd_ref[...], preferred_element_type=jnp.float32)

    @pl.when(k == pl.num_programs(2) - 1)
    def _():
        r_ref[...] += bd_ref[...]


def bn_act_decoder(y, scale, shift, wd_bf16, bd):
    n, h = y.shape
    ddec = wd_bf16.shape[1]
    tn = _pick_parallel_tile(n, TILE_N, 8)
    tdd = _pick_tile(ddec, TILE_D, 128)
    tkh = _pick_tile(h, TILE_K, 128)
    grid = (n // tn, ddec // tdd, h // tkh)
    return pl.pallas_call(
        _bn_act_dec_kernel,
        out_shape=(jax.ShapeDtypeStruct((n, h), jnp.float32),      # embed
                   jax.ShapeDtypeStruct((n, ddec), jnp.float32)),  # reconstruct
        grid_spec=pltpu.PrefetchScalarGridSpec(
            num_scalar_prefetch=0,
            grid=grid,
            in_specs=[
                pl.BlockSpec((tn, tkh), lambda i, j, k: (i, k)),   # y (bf16)
                pl.BlockSpec((1, tkh), lambda i, j, k: (0, k)),    # BN scale
                pl.BlockSpec((1, tkh), lambda i, j, k: (0, k)),    # BN shift
                pl.BlockSpec((tkh, tdd), lambda i, j, k: (k, j)),  # decoder W (bf16)
                pl.BlockSpec((1, tdd), lambda i, j, k: (0, j)),    # decoder bias
            ],
            out_specs=[
                pl.BlockSpec((tn, tkh), lambda i, j, k: (i, k)),
                pl.BlockSpec((tn, tdd), lambda i, j, k: (i, j)),
            ],
        ),
        compiler_params=pltpu.CompilerParams(
            dimension_semantics=("parallel", "arbitrary", "arbitrary"),
            vmem_limit_bytes=_vmem_limit_bytes()),
    )(y, scale, shift, wd_bf16, bd)


# ----------------------------------------------------------------------------
# Params / forward
# ----------------------------------------------------------------------------
def _fold_bn_eval(b, gamma, beta, run_mean, run_var):
    """Fold Linear bias + eval-mode BN into a single (scale, shift) pair."""
    scale = gamma * jax.lax.rsqrt(run_var + BN_EPS)
    shift = (b - run_mean) * scale + beta
    return scale, shift


def init_sae_params(key, in_dim, hid_dim, layers):
    """PyTorch-style init.  Weights stored pre-transposed [Din, Dout] in bf16."""
    if not isinstance(hid_dim, list):
        hid_dim = [hid_dim] * layers
    dims = [in_dim] + hid_dim
    params = {"enc": [], "dec": []}
    for i in range(layers):
        din, dout = dims[i], dims[i + 1]
        key, k1, k2, k3, k4 = jax.random.split(key, 5)
        bound_e = 1.0 / (din ** 0.5)
        bound_d = 1.0 / (dout ** 0.5)
        params["enc"].append(dict(
            w=jax.random.uniform(k1, (din, dout), jnp.float32,
                                 -bound_e, bound_e).astype(jnp.bfloat16),
            b=jax.random.uniform(k2, (1, dout), jnp.float32, -bound_e, bound_e),
            gamma=jnp.ones((1, dout), jnp.float32),
            beta=jnp.zeros((1, dout), jnp.float32),
            run_mean=jnp.zeros((1, dout), jnp.float32),
            run_var=jnp.ones((1, dout), jnp.float32),
        ))
        params["dec"].append(dict(
            w=jax.random.uniform(k3, (dout, din), jnp.float32,
                                 -bound_d, bound_d).astype(jnp.bfloat16),
            b=jax.random.uniform(k4, (1, din), jnp.float32, -bound_d, bound_d),
        ))
    return params


def sae_forward(params, x, level=0, fuse_eval_chain=True):
    x_pre = x
    x_feed = x

    if level > 0:
        ws, scs, shs = [], [], []
        for i in range(level):
            p = params["enc"][i]
            sc, sh = _fold_bn_eval(p["b"], p["gamma"], p["beta"],
                                   p["run_mean"], p["run_var"])
            ws.append(p["w"]); scs.append(sc); shs.append(sh)

        if fuse_eval_chain and _chain_fits_vmem(x, ws):
            # Single pallas_call: intermediates never round-trip through HBM.
            x_pre, x_feed = encoder_chain_eval(x, ws, scs, shs)
        else:
            # Fallback: per-layer tiled eval kernels (bf16 intermediates,
            # f32 for the final x_pre which is a module return value).
            a = x
            for i in range(level):
                out_dtype = jnp.float32 if i == level - 1 else jnp.bfloat16
                a = encoder_layer_eval(a, ws[i], scs[i], shs[i], out_dtype)
            x_pre = a
            x_feed = a

    # Current level: module default is train mode -> BN uses batch statistics.
    # TODO(synk): running_mean/running_var in-place buffer updates (training
    #             state, not part of the returned values) are not emitted.
    p = params["enc"][level]
    y, scale, shift = encoder_layer_train(x_feed, p["w"], p["b"],
                                          p["gamma"], p["beta"])
    d = params["dec"][level]
    embed, reconstruct = bn_act_decoder(y, scale, shift, d["w"], d["b"])
    return embed, reconstruct, x_pre


# ----------------------------------------------------------------------------
# Pure-JAX reference (mirrors the kernels' bf16-MXU / bf16-activation handoffs
# and f32 epilogue math).
# ----------------------------------------------------------------------------
def _ref_forward(params, x, level=0):
    def mm(a, w_bf16):
        return jnp.dot(a.astype(jnp.bfloat16), w_bf16,
                       preferred_element_type=jnp.float32)

    for i in range(level):
        p = params["enc"][i]
        scale, shift = _fold_bn_eval(p["b"], p["gamma"], p["beta"],
                                     p["run_mean"], p["run_var"])
        x = _leaky_relu(mm(x, p["w"]) * scale + shift)   # f32 (bf16 handoff at next mm)

    p = params["enc"][level]
    y = mm(x, p["w"]) + p["b"]
    mean = jnp.mean(y, axis=0, keepdims=True)
    var = jnp.mean(y * y, axis=0, keepdims=True) - mean * mean
    scale = p["gamma"] * jax.lax.rsqrt(var + BN_EPS)
    shift = p["beta"] - mean * scale
    y16 = y.astype(jnp.bfloat16)                         # mirrors kernel-2 bf16 y store
    embed = _leaky_relu(y16.astype(jnp.float32) * scale + shift)

    d = params["dec"][level]
    reconstruct = mm(embed, d["w"]) + d["b"]
    return embed, reconstruct, x


# ----------------------------------------------------------------------------
# main
# ----------------------------------------------------------------------------
if __name__ == "__main__":
    key = jax.random.PRNGKey(0)
    kp, kx = jax.random.split(key)

    # Small but non-trivial shapes: in_dim=640 forces multiple K tiles in the
    # train matmul and multiple Ddec tiles in the level-0 decoder; batch=256
    # gives 2 N tiles on the parallel axis (megacore coverage).
    in_dim, hid_dim, layers = 640, 256, 3
    batch = 256

    params = init_sae_params(kp, in_dim, hid_dim, layers)
    x = jax.random.normal(kx, (batch, in_dim), jnp.float32)

    configs = []
    for level in range(layers):
        configs.append((level, True))
        if level > 0:
            configs.append((level, False))   # also exercise the un-fused fallback

    for level, fuse in configs:
        embed, reconstruct, x_pre = sae_forward(params, x, level=level,
                                                fuse_eval_chain=fuse)
        jax.block_until_ready((embed, reconstruct, x_pre))

        e_ref, r_ref, xp_ref = _ref_forward(params, x, level=level)
        for name, got, want in (("embed", embed, e_ref),
                                ("reconstruct", reconstruct, r_ref),
                                ("x_pre", x_pre, xp_ref)):
            assert got.shape == want.shape, (level, fuse, name, got.shape, want.shape)
            assert got.dtype == want.dtype, (level, fuse, name, got.dtype, want.dtype)
            err = float(jnp.max(jnp.abs(got.astype(jnp.float32)
                                        - want.astype(jnp.float32))))
            # Tolerance accounts for bf16 rounding of y amplified by the BN scale
            # (kernel and reference round y identically; residual diffs are
            # accumulation-order only, so real bugs show up orders larger).
            assert err < 3e-2, f"level={level} fuse={fuse} {name} max abs err {err}"

    print("KERNEL_OK")
</pallas_src>

<mosaic_0001>
module attributes {stable_mosaic.version = 11 : i64} {
  func.func @_enc_train_kernel(%arg0: i32, %arg1: i32, %arg2: i32, %arg3: memref<128x128xf32, #tpu.memory_space<vmem>>, %arg4: memref<128x256xbf16, #tpu.memory_space<vmem>>, %arg5: memref<1x256xf32, #tpu.memory_space<vmem>>, %arg6: memref<128x256xbf16, #tpu.memory_space<vmem>>, %arg7: memref<1x1x256xf32, #tpu.memory_space<vmem>>, %arg8: memref<1x1x256xf32, #tpu.memory_space<vmem>>, %arg9: memref<128x256xf32, #tpu.memory_space<vmem>>) attributes {dimension_semantics = [#tpu.dimension_semantics<parallel>, #tpu.dimension_semantics<parallel>, #tpu.dimension_semantics<arbitrary>], iteration_bounds = array<i64: 2, 1, 5>, scalar_prefetch = 0 : i64, scratch_operands = 1 : i64, tpu.core_type = #tpu.core_type<tc>, window_params = [{transform_indices = @transform_0, window_bounds = array<i64: 128, 128>}, {transform_indices = @transform_1, window_bounds = array<i64: 128, 256>}, {transform_indices = @transform_2, window_bounds = array<i64: 1, 256>}, {transform_indices = @transform_3, window_bounds = array<i64: 128, 256>}, {transform_indices = @transform_4, window_bounds = array<i64: 1, 1, 256>}, {transform_indices = @transform_5, window_bounds = array<i64: 1, 1, 256>}]} {
    %c0_i32 = arith.constant 0 : i32
    %0 = arith.cmpi eq, %arg2, %c0_i32 : i32
    %1 = arith.extui %0 : i1 to i32
    %c0_i32_0 = arith.constant 0 : i32
    %2 = arith.cmpi ne, %1, %c0_i32_0 : i32
    scf.if %2 {
      %cst_9 = arith.constant 0.000000e+00 : f32
      %13 = vector.broadcast %cst_9 : f32 to vector<128x256xf32>
      %c0_10 = arith.constant 0 : index
      %c0_11 = arith.constant 0 : index
      %14 = vector.load %arg9[%c0_10, %c0_11] : memref<128x256xf32, #tpu.memory_space<vmem>>, vector<128x256xf32>
      tpu.vector_store %arg9[%c0_10, %c0_11], %13 {strides = array<i32>} : memref<128x256xf32, #tpu.memory_space<vmem>>, vector<128x256xf32>,
    } else {
    }
    %c0 = arith.constant 0 : index
    %c0_1 = arith.constant 0 : index
    %3 = vector.load %arg9[%c0, %c0_1] : memref<128x256xf32, #tpu.memory_space<vmem>>, vector<128x256xf32>
    %c0_2 = arith.constant 0 : index
    %c0_3 = arith.constant 0 : index
    %4 = vector.load %arg3[%c0_2, %c0_3] : memref<128x128xf32, #tpu.memory_space<vmem>>, vector<128x128xf32>
    %5 = arith.truncf %4 : vector<128x128xf32> to vector<128x128xbf16>
    %c0_4 = arith.constant 0 : index
    %c0_5 = arith.constant 0 : index
    %6 = vector.load %arg4[%c0_4, %c0_5] : memref<128x256xbf16, #tpu.memory_space<vmem>>, vector<128x256xbf16>
    %cst = arith.constant dense<0.000000e+00> : vector<128x256xf32>
    %7 = tpu.matmul %5, %6, %cst {dimension_numbers = #tpu.dot_dimension_numbers<[1], [0], [0], [1], [0, 0, 1, 1], [], []>} : vector<128x128xbf16>, vector<128x256xbf16>, vector<128x256xf32> -> vector<128x256xf32>
    %8 = arith.addf %3, %7 : vector<128x256xf32>
    %c0_6 = arith.constant 0 : index
    %c0_7 = arith.constant 0 : index
    %9 = vector.load %arg9[%c0_6, %c0_7] : memref<128x256xf32, #tpu.memory_space<vmem>>, vector<128x256xf32>
    tpu.vector_store %arg9[%c0_6, %c0_7], %8 {strides = array<i32>} : memref<128x256xf32, #tpu.memory_space<vmem>>, vector<128x256xf32>,
    %c4_i32 = arith.constant 4 : i32
    %10 = arith.cmpi eq, %arg2, %c4_i32 : i32
    %11 = arith.extui %10 : i1 to i32
    %c0_i32_8 = arith.constant 0 : i32
    %12 = arith.cmpi ne, %11, %c0_i32_8 : i32
    scf.if %12 {
      %c0_9 = arith.constant 0 : index
      %c0_10 = arith.constant 0 : index
      %13 = vector.load %arg9[%c0_9, %c0_10] : memref<128x256xf32, #tpu.memory_space<vmem>>, vector<128x256xf32>
      %c0_11 = arith.constant 0 : index
      %c0_12 = arith.constant 0 : index
      %14 = vector.load %arg5[%c0_11, %c0_12] : memref<1x256xf32, #tpu.memory_space<vmem>>, vector<1x256xf32>
      %15 = vector.broadcast %14 : vector<1x256xf32> to vector<128x256xf32>
      %16 = arith.addf %13, %15 : vector<128x256xf32>
      %17 = arith.truncf %16 : vector<128x256xf32> to vector<128x256xbf16>
      %c0_13 = arith.constant 0 : index
      %c0_14 = arith.constant 0 : index
      %18 = vector.load %arg6[%c0_13, %c0_14] : memref<128x256xbf16, #tpu.memory_space<vmem>>, vector<128x256xbf16>
      tpu.vector_store %arg6[%c0_13, %c0_14], %17 {strides = array<i32>} : memref<128x256xbf16, #tpu.memory_space<vmem>>, vector<128x256xbf16>,
      %cst_15 = arith.constant dense<0.000000e+00> : vector<256xf32>
      %19 = vector.multi_reduction <add>, %16, %cst_15 [0] : vector<128x256xf32> to vector<256xf32>
      %20 = vector.shape_cast %19 : vector<256xf32> to vector<1x256xf32>
      %21 = arith.mulf %16, %16 : vector<128x256xf32>
      %cst_16 = arith.constant dense<0.000000e+00> : vector<256xf32>
      %22 = vector.multi_reduction <add>, %21, %cst_16 [0] : vector<128x256xf32> to vector<256xf32>
      %23 = vector.shape_cast %22 : vector<256xf32> to vector<1x256xf32>
      %24 = vector.shape_cast %20 : vector<1x256xf32> to vector<1x1x256xf32>
      %c0_17 = arith.constant 0 : index
      %c0_18 = arith.constant 0 : index
      %c0_19 = arith.constant 0 : index
      %25 = vector.load %arg7[%c0_17, %c0_18, %c0_19] : memref<1x1x256xf32, #tpu.memory_space<vmem>>, vector<1x1x256xf32>
      tpu.vector_store %arg7[%c0_17, %c0_18, %c0_19], %24 {strides = array<i32>} : memref<1x1x256xf32, #tpu.memory_space<vmem>>, vector<1x1x256xf32>,
      %26 = vector.shape_cast %23 : vector<1x256xf32> to vector<1x1x256xf32>
      %c0_20 = arith.constant 0 : index
      %c0_21 = arith.constant 0 : index
      %c0_22 = arith.constant 0 : index
      %27 = vector.load %arg8[%c0_20, %c0_21, %c0_22] : memref<1x1x256xf32, #tpu.memory_space<vmem>>, vector<1x1x256xf32>
      tpu.vector_store %arg8[%c0_20, %c0_21, %c0_22], %26 {strides = array<i32>} : memref<1x1x256xf32, #tpu.memory_space<vmem>>, vector<1x1x256xf32>,
    } else {
    }
    return
  }
  func.func @transform_0(%arg0: i32, %arg1: i32, %arg2: i32) -> (i32, i32) {
    %c0_i32 = arith.constant 0 : i32
    return %arg0, %arg2 : i32, i32
  }
  func.func @transform_1(%arg0: i32, %arg1: i32, %arg2: i32) -> (i32, i32) {
    %c0_i32 = arith.constant 0 : i32
    return %arg2, %arg1 : i32, i32
  }
  func.func @transform_2(%arg0: i32, %arg1: i32, %arg2: i32) -> (i32, i32) {
    %c0_i32 = arith.constant 0 : i32
    %c0_i32_0 = arith.constant 0 : i32
    return %c0_i32, %arg1 : i32, i32
  }
  func.func @transform_3(%arg0: i32, %arg1: i32, %arg2: i32) -> (i32, i32) {
    %c0_i32 = arith.constant 0 : i32
    return %arg0, %arg1 : i32, i32
  }
  func.func @transform_4(%arg0: i32, %arg1: i32, %arg2: i32) -> (i32, i32, i32) {
    %c0_i32 = arith.constant 0 : i32
    %c0_i32_0 = arith.constant 0 : i32
    return %arg0, %c0_i32, %arg1 : i32, i32, i32
  }
  func.func @transform_5(%arg0: i32, %arg1: i32, %arg2: i32) -> (i32, i32, i32) {
    %c0_i32 = arith.constant 0 : i32
    %c0_i32_0 = arith.constant 0 : i32
    return %arg0, %c0_i32, %arg1 : i32, i32, i32
  }
}

</mosaic_0001>

<llo_original>
// kernel: tpu_custom_call.1
$region0: #{tpu_custom_call.1}
  #allocation0 [shape = 'u32[]', space=smem, size = 0x4, offset = 0x4, fixed_abs, tag = 'smem constant byte address 0x4 - core index']
  #allocation1 [shape = 'u32[144,128]{1,0:T(1,128)}', space=vmem, size = 0x12000, scoped, tag = 'internal scratch']
  #allocation2 [shape = 'f32[128,256]{1,0:T(8,128)}', space=vmem, size = 0x20000, scoped, tag = 'scratch operand']
  %s0 = inlined_call_operand.hbm [shape: f32[256,640], index: 0, kind: input, shape index: {}]
  %s1 = inlined_call_operand.hbm [shape: bf16[640,256], index: 1, kind: input, shape index: {}]
  %s2 = inlined_call_operand.vmem [shape: f32[1,256], index: 2, kind: input, shape index: {}]
  %s3 = inlined_call_operand.hbm [shape: bf16[256,256], index: 3, kind: output, shape index: {0}]
  %s4 = inlined_call_operand.hbm [shape: f32[2,1,256], index: 4, kind: output, shape index: {1}]
  %s5 = inlined_call_operand.hbm [shape: f32[2,1,256], index: 5, kind: output, shape index: {2}]
  %6 = xla_tuple %s3, %s4, %s5
  %s7 = sld [smem:[#allocation0]]
  $region77: #{tpu_custom_call.1} parent=0
    _
  %s9 = ssub.s32 1, %s7
  %s10 = scalar_select 0, %s9, %s7
  $region1: #{tpu_custom_call.1} parent=0
    #allocation3 [shape = 'u8[131072]{0}', space=vmem, size = 0x20000, scoped, tag = 'input window, operand 0']
    #allocation4 [shape = 's32[2]{0}', space=sflag, size = 0x8, scoped, tag = 'scoped memory for tpu_custom_call.1']
    #allocation5 [shape = 's32[2]{0}', space=sflag, size = 0x8, scoped, tag = 'scoped memory for tpu_custom_call.1']
    #allocation6 [shape = 'u8[131072]{0}', space=vmem, size = 0x20000, scoped, tag = 'input window, operand 1']
    #allocation7 [shape = 's32[2]{0}', space=sflag, size = 0x8, scoped, tag = 'scoped memory for tpu_custom_call.1']
    #allocation8 [shape = 'u8[131072]{0}', space=vmem, size = 0x20000, scoped, tag = 'output window, operand 0']
    #allocation9 [shape = 'u8[2048]{0}', space=vmem, size = 0x800, scoped, tag = 'output window, operand 1']
    #allocation10 [shape = 's32[2]{0}', space=sflag, size = 0x8, scoped, tag = 'scoped memory for tpu_custom_call.1']
    #allocation11 [shape = 'u8[2048]{0}', space=vmem, size = 0x800, scoped, tag = 'output window, operand 2']
    %11 = vsyncpa [#allocation4], 0
    %s12 = scalar_lea.sflag [#allocation4], 1
    %13 = vsyncpa %s12, 0
    %14 = vsyncpa [#allocation7], 0
    %s15 = scalar_lea.sflag [#allocation7], 1
    %16 = vsyncpa %s15, 0
    %17 = vsyncpa [#allocation5], 0
    %s18 = scalar_lea.sflag [#allocation5], 1
    %19 = vsyncpa %s18, 0
    %20 = vsyncpa [#allocation10], 0
    %s21 = scalar_lea.sflag [#allocation10], 1
    %22 = vsyncpa %s21, 0
    loop: start=0, step=1, limit=12
    $region2: #{tpu_custom_call.1} parent=1 // loop_pre_header
      _
    $region3: #{tpu_custom_call.1} parent=1 // loop_header
      %s24 = sphi 0, %s28
      %p25 = scmp.ge.s32.totalorder %s24, 12
      %s31 = sphi 0, %s50
      %s32 = sphi 0, %s46
      %s33 = sphi 0, %s42
      %s34 = sphi 0, %s31
      %s35 = sphi 0, %s32
      %s36 = sphi 0, %s33
      %s37 = sphi 0, %s34
      %s38 = sphi 0, %s35
      %s39 = sphi 0, %s36
      %s55 = sphi 0, %s57
      %s58 = sphi 0, %s55
      %s59 = sphi 0, %s58
      %s75 = sphi 0, %s59
      %s83 = sphi 0, %s85
      %s86 = sphi 0, %s83
      %s87 = sphi 0, %s86
      %s103 = sphi 0, %s87
      %s109 = sphi 0, %s111
      %s112 = sphi 0, %s109
      %s113 = sphi 0, %s112
      %s129 = sphi 0, %s113
      %s137 = sphi 0, %s139
      %s140 = sphi 0, %s137
      %s141 = sphi 0, %s140
      %s157 = sphi 0, %s141
      %s165 = sphi 0, %s167
      %s168 = sphi 0, %s165
      %s169 = sphi 0, %s168
      %s185 = sphi 0, %s169
      %s193 = sphi 0, %s195
      %s196 = sphi 0, %s193
      %s197 = sphi 0, %s196
      %s213 = sphi 0, %s197
    $region4: #{tpu_custom_call.1} parent=1 // loop_header_branch
      %27 = sbr.rel (%p25) target = $region8
    $region5: #{tpu_custom_call.1} parent=1 // loop_body
      %s29 = ssub.s32 %s24, 1
      %s30 = ssub.s32 %s24, 2
      %s40 = sadd.s32 1, %s33
      %p41 = scmp.ge.s32.totalorder %s40, 5
      %s42 = scalar_select %p41, 0, %s40
      %s43 = sadd.s32 1, %s32
      %s44 = scalar_select %p41, %s43, %s32
      %p45 = scmp.ge.s32.totalorder %s44, 1
      %s46 = scalar_select %p45, 0, %s44
      %s47 = sadd.s32 1, %s31
      %s48 = scalar_select %p45, %s47, %s31
      %p49 = scmp.ge.s32.totalorder %s48, 2
      %s50 = scalar_select %p49, 0, %s48
      %s51 = ssub.s32 %s31, %s50
      %s52 = ssub.s32 %s33, %s42
      %s53 = sor.u32 %s51, %s52
      %p54 = scmp.eq.s32.totalorder %s53, 0
      %s56 = sadd.s32 %s55, 1
      %s57 = scalar_select %p54, %s55, %s56
      %p60 = pneg %p54
      %p61 = scmp.eq.s32.totalorder %s24, 9
      %p62 = por %p60, %p61
      %p63 = scmp.ne.s32.totalorder %s55, %s58
      %p64 = scmp.eq.s32.totalorder %s24, 0
      %p65 = por %p63, %p64
      %p66 = scmp.ne.s32.totalorder %s55, %s58
      %p67 = scmp.eq.s32.totalorder %s29, 9
      %p68 = por %p66, %p67
      %p69 = scmp.ne.s32.totalorder %s58, %s59
      %p70 = scmp.eq.s32.totalorder %s29, 0
      %p71 = por %p69, %p70
      %p72 = scmp.ne.s32.totalorder %s58, %s59
      %p73 = scmp.eq.s32.totalorder %s30, 9
      %p74 = por %p72, %p73
      %p76 = scmp.ne.s32.totalorder %s59, %s75
      %p77 = scmp.eq.s32.totalorder %s30, 0
      %p78 = por %p76, %p77
      %s79 = ssub.s32 %s33, %s42
      %s80 = ssub.s32 %s32, %s46
      %s81 = sor.u32 %s79, %s80
      %p82 = scmp.eq.s32.totalorder %s81, 0
      %s84 = sadd.s32 %s83, 1
      %s85 = scalar_select %p82, %s83, %s84
      %p88 = pneg %p82
      %p89 = scmp.eq.s32.totalorder %s24, 9
      %p90 = por %p88, %p89
      %p91 = scmp.ne.s32.totalorder %s83, %s86
      %p92 = scmp.eq.s32.totalorder %s24, 0
      %p93 = por %p91, %p92
      %p94 = scmp.ne.s32.totalorder %s83, %s86
      %p95 = scmp.eq.s32.totalorder %s29, 9
      %p96 = por %p94, %p95
      %p97 = scmp.ne.s32.totalorder %s86, %s87
      %p98 = scmp.eq.s32.totalorder %s29, 0
      %p99 = por %p97, %p98
      %p100 = scmp.ne.s32.totalorder %s86, %s87
      %p101 = scmp.eq.s32.totalorder %s30, 9
      %p102 = por %p100, %p101
      %p104 = scmp.ne.s32.totalorder %s87, %s103
      %p105 = scmp.eq.s32.totalorder %s30, 0
      %p106 = por %p104, %p105
      %s107 = ssub.s32 %s32, %s46
      %p108 = scmp.eq.s32.totalorder %s107, 0
      %s110 = sadd.s32 %s109, 1
      %s111 = scalar_select %p108, %s109, %s110
      %p114 = pneg %p108
      %p115 = scmp.eq.s32.totalorder %s24, 9
      %p116 = por %p114, %p115
      %p117 = scmp.ne.s32.totalorder %s109, %s112
      %p118 = scmp.eq.s32.totalorder %s24, 0
      %p119 = por %p117, %p118
      %p120 = scmp.ne.s32.totalorder %s109, %s112
      %p121 = scmp.eq.s32.totalorder %s29, 9
      %p122 = por %p120, %p121
      %p123 = scmp.ne.s32.totalorder %s112, %s113
      %p124 = scmp.eq.s32.totalorder %s29, 0
      %p125 = por %p123, %p124
      %p126 = scmp.ne.s32.totalorder %s112, %s113
      %p127 = scmp.eq.s32.totalorder %s30, 9
      %p128 = por %p126, %p127
      %p130 = scmp.ne.s32.totalorder %s113, %s129
      %p131 = scmp.eq.s32.totalorder %s30, 0
      %p132 = por %p130, %p131
      %s133 = ssub.s32 %s31, %s50
      %s134 = ssub.s32 %s32, %s46
      %s135 = sor.u32 %s133, %s134
      %p136 = scmp.eq.s32.totalorder %s135, 0
      %s138 = sadd.s32 %s137, 1
      %s139 = scalar_select %p136, %s137, %s138
      %p142 = pneg %p136
      %p143 = scmp.eq.s32.totalorder %s24, 9
      %p144 = por %p142, %p143
      %p145 = scmp.ne.s32.totalorder %s137, %s140
      %p146 = scmp.eq.s32.totalorder %s24, 0
      %p147 = por %p145, %p146
      %p148 = scmp.ne.s32.totalorder %s137, %s140
      %p149 = scmp.eq.s32.totalorder %s29, 9
      %p150 = por %p148, %p149
      %p151 = scmp.ne.s32.totalorder %s140, %s141
      %p152 = scmp.eq.s32.totalorder %s29, 0
      %p153 = por %p151, %p152
      %p154 = scmp.ne.s32.totalorder %s140, %s141
      %p155 = scmp.eq.s32.totalorder %s30, 9
      %p156 = por %p154, %p155
      %p158 = scmp.ne.s32.totalorder %s141, %s157
      %p159 = scmp.eq.s32.totalorder %s30, 0
      %p160 = por %p158, %p159
      %s161 = ssub.s32 %s31, %s50
      %s162 = ssub.s32 %s32, %s46
      %s163 = sor.u32 %s161, %s162
      %p164 = scmp.eq.s32.totalorder %s163, 0
      %s166 = sadd.s32 %s165, 1
      %s167 = scalar_select %p164, %s165, %s166
      %p170 = pneg %p164
      %p171 = scmp.eq.s32.totalorder %s24, 9
      %p172 = por %p170, %p171
      %p173 = scmp.ne.s32.totalorder %s165, %s168
      %p174 = scmp.eq.s32.totalorder %s24, 0
      %p175 = por %p173, %p174
      %p176 = scmp.ne.s32.totalorder %s165, %s168
      %p177 = scmp.eq.s32.totalorder %s29, 9
      %p178 = por %p176, %p177
      %p179 = scmp.ne.s32.totalorder %s168, %s169
      %p180 = scmp.eq.s32.totalorder %s29, 0
      %p181 = por %p179, %p180
      %p182 = scmp.ne.s32.totalorder %s168, %s169
      %p183 = scmp.eq.s32.totalorder %s30, 9
      %p184 = por %p182, %p183
      %p186 = scmp.ne.s32.totalorder %s169, %s185
      %p187 = scmp.eq.s32.totalorder %s30, 0
      %p188 = por %p186, %p187
      %s189 = ssub.s32 %s31, %s50
      %s190 = ssub.s32 %s32, %s46
      %s191 = sor.u32 %s189, %s190
      %p192 = scmp.eq.s32.totalorder %s191, 0
      %s194 = sadd.s32 %s193, 1
      %s195 = scalar_select %p192, %s193, %s194
      %p198 = pneg %p192
      %p199 = scmp.eq.s32.totalorder %s24, 9
      %p200 = por %p198, %p199
      %p201 = scmp.ne.s32.totalorder %s193, %s196
      %p202 = scmp.eq.s32.totalorder %s24, 0
      %p203 = por %p201, %p202
      %p204 = scmp.ne.s32.totalorder %s193, %s196
      %p205 = scmp.eq.s32.totalorder %s29, 9
      %p206 = por %p204, %p205
      %p207 = scmp.ne.s32.totalorder %s196, %s197
      %p208 = scmp.eq.s32.totalorder %s29, 0
      %p209 = por %p207, %p208
      %p210 = scmp.ne.s32.totalorder %s196, %s197
      %p211 = scmp.eq.s32.totalorder %s30, 9
      %p212 = por %p210, %p211
      %p214 = scmp.ne.s32.totalorder %s197, %s213
      %p215 = scmp.eq.s32.totalorder %s30, 0
      %p216 = por %p214, %p215
      %p217 = scmp.le.s32.totalorder 1, %s24
      %p218 = scmp.lt.s32.totalorder %s24, 11
      %p219 = pnand %p217, %p218
      %p220 = pneg %p219
      // Predicated region
      $region9: #{tpu_custom_call.1} parent=5 // pred_check
        _
      $region10: #{tpu_custom_call.1} parent=5 // pred_check_branch
        %222 = sbr.rel (%p219) target = $region12
      $region11: #{tpu_custom_call.1} parent=5 // pred_region
        %s223 = ssub.s32 %s24, 1
        // Predicated region
        $region13: #{tpu_custom_call.1} parent=11 // pred_check
          %p224 = pneg %p125
        $region14: #{tpu_custom_call.1} parent=11 // pred_check_branch
          %226 = sbr.rel (%p224) target = $region16
        $region15: #{tpu_custom_call.1} parent=11 // pred_region
          %s227 = smul.u32 2, %s35
          %p228 = scmp.lt.s32.totalorder %s227, 1
          %s229 = scalar_select %p228, %s227, 1
          %s230 = scalar_lea.vmem %s2, %s229
          %s231 = smul.u32 2, %s35
        $region16: #{tpu_custom_call.1} parent=11 // pred_fallthru
          _
      $region12: #{tpu_custom_call.1} parent=5 // pred_fallthru
        _
      %p232 = scmp.lt.s32.totalorder %s24, 10
      // Predicated region
      $region17: #{tpu_custom_call.1} parent=5 // pred_check
        %p233 = pneg %p232
      $region18: #{tpu_custom_call.1} parent=5 // pred_check_branch
        %235 = sbr.rel (%p233) target = $region20
      $region19: #{tpu_custom_call.1} parent=5 // pred_region
        // Predicated region
        $region21: #{tpu_custom_call.1} parent=19 // pred_check
          %p236 = pneg %p65
        $region22: #{tpu_custom_call.1} parent=19 // pred_check_branch
          %238 = sbr.rel (%p236) target = $region24
        $region23: #{tpu_custom_call.1} parent=19 // pred_region
          %s239 = sand.u32 %s55, 1
          %s240 = scalar_lea.sflag [#allocation4], %s239
          %s241 = sand.u32 %s55, 1
          %s242 = smul.addr %s241, 128
          %s243 = scalar_lea.vmem [#allocation3], %s242
          %s244 = smul.u32 16, %s31
          %s246 = ssub.s32 2048, 2048
          %247 = vsyncadd %s240, %s246
          %s248 = smul.addr %s244, 5
          %s249 = sadd.s32 %s33, %s248
          %s250 = smul.addr %s249, 128
          %s251 = scalar_lea.hbm %s0, %s250
          %s252 = sshll.u32 %s243, 4
          %s253 = int_to_ptr.vmem [resolvable:$true] %s252
          %258 = dma.hbm_to_vmem [thread:$0]  %s251, 2048, %s253, %s240, 640, 128, 8
        $region24: #{tpu_custom_call.1} parent=19 // pred_fallthru
          _
        // Predicated region
        $region25: #{tpu_custom_call.1} parent=19 // pred_check
          %p259 = pneg %p93
        $region26: #{tpu_custom_call.1} parent=19 // pred_check_branch
          %261 = sbr.rel (%p259) target = $region28
        $region27: #{tpu_custom_call.1} parent=19 // pred_region
          %s262 = sand.u32 %s83, 1
          %s263 = scalar_lea.sflag [#allocation7], %s262
          %s264 = sand.u32 %s83, 1
          %s265 = smul.addr %s264, 128
          %s266 = scalar_lea.vmem [#allocation6], %s265
          %s267 = smul.u32 16, %s33
          %s268 = smul.u32 2, %s32
          %s270 = ssub.s32 2048, 2048
          %271 = vsyncadd %s263, %s270
          %s272 = smul.addr %s267, 2
          %s273 = sadd.s32 %s268, %s272
          %s274 = smul.addr %s273, 64
          %s275 = scalar_lea.hbm %s1, %s274
          %s276 = sshll.u32 %s266, 4
          %s277 = int_to_ptr.vmem [resolvable:$true] %s276
          %282 = dma.hbm_to_vmem [thread:$0]  %s275, 2048, %s277, %s263, 128, 128, 8
        $region28: #{tpu_custom_call.1} parent=19 // pred_fallthru
          _
      $region20: #{tpu_custom_call.1} parent=5 // pred_fallthru
        _
      %p283 = scmp.le.s32.totalorder 1, %s24
      %p284 = scmp.lt.s32.totalorder %s24, 11
      %p285 = pnand %p283, %p284
      %p286 = pneg %p285
      // Predicated region
      $region29: #{tpu_custom_call.1} parent=5 // pred_check
        _
      $region30: #{tpu_custom_call.1} parent=5 // pred_check_branch
        %288 = sbr.rel (%p285) target = $region32
      $region31: #{tpu_custom_call.1} parent=5 // pred_region
        %s289 = ssub.s32 %s24, 1
        %s290 = sand.u32 %s58, 1
        %s291 = scalar_lea.sflag [#allocation4], %s290
        %s292 = sand.u32 %s58, 1
        %s293 = smul.addr %s292, 128
        %s294 = scalar_lea.vmem [#allocation3], %s293
        // Predicated region
        $region33: #{tpu_custom_call.1} parent=31 // pred_check
          %p295 = pneg %p71
        $region34: #{tpu_custom_call.1} parent=31 // pred_check_branch
          %297 = sbr.rel (%p295) target = $region36
        $region35: #{tpu_custom_call.1} parent=31 // pred_region
          %298 = dma.done %s291, 2048
        $region36: #{tpu_custom_call.1} parent=31 // pred_fallthru
          _
        %s299 = sand.u32 %s86, 1
        %s300 = scalar_lea.sflag [#allocation7], %s299
        %s301 = sand.u32 %s86, 1
        %s302 = smul.addr %s301, 128
        %s303 = scalar_lea.vmem [#allocation6], %s302
        // Predicated region
        $region37: #{tpu_custom_call.1} parent=31 // pred_check
          %p304 = pneg %p99
        $region38: #{tpu_custom_call.1} parent=31 // pred_check_branch
          %306 = sbr.rel (%p304) target = $region40
        $region39: #{tpu_custom_call.1} parent=31 // pred_region
          %307 = dma.done %s300, 2048
        $region40: #{tpu_custom_call.1} parent=31 // pred_fallthru
          _
        %s308 = sand.u32 %s58, 1
        %s309 = scalar_lea.sflag [#allocation4], %s308
        %s310 = sand.u32 %s58, 1
        %s311 = smul.addr %s310, 128
        %s312 = scalar_lea.vmem [#allocation3], %s311
        %p313 = pneg %p71
        %p314 = pneg %p68
        %s315 = sand.u32 %s86, 1
        %s316 = scalar_lea.sflag [#allocation7], %s315
        %s317 = sand.u32 %s86, 1
        %s318 = smul.addr %s317, 128
        %s319 = scalar_lea.vmem [#allocation6], %s318
        %p320 = pneg %p99
        %p321 = pneg %p96
        %s322 = smul.u32 2, %s35
        %p323 = scmp.lt.s32.totalorder %s322, 1
        %s324 = scalar_select %p323, %s322, 1
        %s325 = scalar_lea.vmem %s2, %s324
        %p326 = pneg %p125
        %p327 = pneg %p122
        %p328 = pneg %p153
        %p329 = pneg %p150
        %s330 = sand.u32 %s140, 1
        %s331 = scalar_lea.sflag [#allocation5], %s330
        %s332 = sand.u32 %s140, 1
        %s333 = smul.addr %s332, 128
        %s334 = scalar_lea.vmem [#allocation8], %s333
        %p335 = pneg %p181
        %p336 = pneg %p178
        %s337 = sand.u32 %s29, 1
        %s338 = scalar_lea.sflag [#allocation10], %s337
        %s339 = sand.u32 %s168, 1
        %s340 = smul.addr %s339, 2
        %s341 = scalar_lea.vmem [#allocation9], %s340
        %p342 = pneg %p209
        %p343 = pneg %p206
        %s344 = sand.u32 %s29, 1
        %s345 = scalar_lea.sflag [#allocation10], %s344
        %s346 = sand.u32 %s196, 1
        %s347 = smul.addr %s346, 2
        %s348 = scalar_lea.vmem [#allocation11], %s347
        %s349 = smul.u32 16, %s34
        %s350 = smul.u32 16, %s36
        %s351 = smul.u32 2, %s35
        %s352 = smul.u32 2, %s35
        %p353 = scmp.lt.s32.totalorder %s352, 1
        %s354 = scalar_select %p353, %s352, 1
        %s355 = scalar_lea.vmem %s2, %s354
        %s356 = smul.u32 2, %s35
        %s357 = smul.u32 16, %s34
        %s358 = smul.u32 2, %s35
        %s359 = smul.u32 2, %s35
        %s360 = smul.u32 2, %s35
        %p362 = scmp.eq.s32.totalorder %s36, 0
        // Predicated region
        $region41: #{tpu_custom_call.1} parent=31 // pred_check
          %p363 = pneg %p362
        $region42: #{tpu_custom_call.1} parent=31 // pred_check_branch
          %365 = sbr.rel (%p363) target = $region44
        $region43: #{tpu_custom_call.1} parent=31 // pred_region
          %366 = vst [vmem:[#allocation2] sm:$0xff] 0.0
          %367 = vst [vmem:[#allocation2 + $0x8] sm:$0xff] 0.0
          %368 = vst [vmem:[#allocation2 + $0x10] sm:$0xff] 0.0
          %369 = vst [vmem:[#allocation2 + $0x18] sm:$0xff] 0.0
          %370 = vst [vmem:[#allocation2 + $0x20] sm:$0xff] 0.0
          %371 = vst [vmem:[#allocation2 + $0x28] sm:$0xff] 0.0
          %372 = vst [vmem:[#allocation2 + $0x30] sm:$0xff] 0.0
          %373 = vst [vmem:[#allocation2 + $0x38] sm:$0xff] 0.0
          %374 = vst [vmem:[#allocation2 + $0x40] sm:$0xff] 0.0
          %375 = vst [vmem:[#allocation2 + $0x48] sm:$0xff] 0.0
          %376 = vst [vmem:[#allocation2 + $0x50] sm:$0xff] 0.0
          %377 = vst [vmem:[#allocation2 + $0x58] sm:$0xff] 0.0
          %378 = vst [vmem:[#allocation2 + $0x60] sm:$0xff] 0.0
          %379 = vst [vmem:[#allocation2 + $0x68] sm:$0xff] 0.0
          %380 = vst [vmem:[#allocation2 + $0x70] sm:$0xff] 0.0
          %381 = vst [vmem:[#allocation2 + $0x78] sm:$0xff] 0.0
          %382 = vst [vmem:[#allocation2 + $0x80] sm:$0xff] 0.0
          %383 = vst [vmem:[#allocation2 + $0x88] sm:$0xff] 0.0
          %384 = vst [vmem:[#allocation2 + $0x90] sm:$0xff] 0.0
          %385 = vst [vmem:[#allocation2 + $0x98] sm:$0xff] 0.0
          %386 = vst [vmem:[#allocation2 + $0xa0] sm:$0xff] 0.0
          %387 = vst [vmem:[#allocation2 + $0xa8] sm:$0xff] 0.0
          %388 = vst [vmem:[#allocation2 + $0xb0] sm:$0xff] 0.0
          %389 = vst [vmem:[#allocation2 + $0xb8] sm:$0xff] 0.0
          %390 = vst [vmem:[#allocation2 + $0xc0] sm:$0xff] 0.0
          %391 = vst [vmem:[#allocation2 + $0xc8] sm:$0xff] 0.0
          %392 = vst [vmem:[#allocation2 + $0xd0] sm:$0xff] 0.0
          %393 = vst [vmem:[#allocation2 + $0xd8] sm:$0xff] 0.0
          %394 = vst [vmem:[#allocation2 + $0xe0] sm:$0xff] 0.0
          %395 = vst [vmem:[#allocation2 + $0xe8] sm:$0xff] 0.0
          %396 = vst [vmem:[#allocation2 + $0xf0] sm:$0xff] 0.0
          %397 = vst [vmem:[#allocation2 + $0xf8] sm:$0xff] 0.0
        $region44: #{tpu_custom_call.1} parent=31 // pred_fallthru
          _
        %v398 = vld [vmem:[#allocation2] sm:$0xff]
        %v399 = vld [vmem:[#allocation2 + $0x8] sm:$0xff]
        %v400 = vld [vmem:[#allocation2 + $0x10] sm:$0xff]
        %v401 = vld [vmem:[#allocation2 + $0x18] sm:$0xff]
        %v402 = vld [vmem:[#allocation2 + $0x20] sm:$0xff]
        %v403 = vld [vmem:[#allocation2 + $0x28] sm:$0xff]
        %v404 = vld [vmem:[#allocation2 + $0x30] sm:$0xff]
        %v405 = vld [vmem:[#allocation2 + $0x38] sm:$0xff]
        %v406 = vld [vmem:[#allocation2 + $0x40] sm:$0xff]
        %v407 = vld [vmem:[#allocation2 + $0x48] sm:$0xff]
        %v408 = vld [vmem:[#allocation2 + $0x50] sm:$0xff]
        %v409 = vld [vmem:[#allocation2 + $0x58] sm:$0xff]
        %v410 = vld [vmem:[#allocation2 + $0x60] sm:$0xff]
        %v411 = vld [vmem:[#allocation2 + $0x68] sm:$0xff]
        %v412 = vld [vmem:[#allocation2 + $0x70] sm:$0xff]
        %v413 = vld [vmem:[#allocation2 + $0x78] sm:$0xff]
        %v414 = vld [vmem:[#allocation2 + $0x80] sm:$0xff]
        %v415 = vld [vmem:[#allocation2 + $0x88] sm:$0xff]
        %v416 = vld [vmem:[#allocation2 + $0x90] sm:$0xff]
        %v417 = vld [vmem:[#allocation2 + $0x98] sm:$0xff]
        %v418 = vld [vmem:[#allocation2 + $0xa0] sm:$0xff]
        %v419 = vld [vmem:[#allocation2 + $0xa8] sm:$0xff]
        %v420 = vld [vmem:[#allocation2 + $0xb0] sm:$0xff]
        %v421 = vld [vmem:[#allocation2 + $0xb8] sm:$0xff]
        %v422 = vld [vmem:[#allocation2 + $0xc0] sm:$0xff]
        %v423 = vld [vmem:[#allocation2 + $0xc8] sm:$0xff]
        %v424 = vld [vmem:[#allocation2 + $0xd0] sm:$0xff]
        %v425 = vld [vmem:[#allocation2 + $0xd8] sm:$0xff]
        %v426 = vld [vmem:[#allocation2 + $0xe0] sm:$0xff]
        %v427 = vld [vmem:[#allocation2 + $0xe8] sm:$0xff]
        %v428 = vld [vmem:[#allocation2 + $0xf0] sm:$0xff]
        %v429 = vld [vmem:[#allocation2 + $0xf8] sm:$0xff]
        %v430 = vld [vmem:[%s294] sm:$0xff]
        %v431 = vld [vmem:[%s294 + $0x8] sm:$0xff]
        %v432 = vld [vmem:[%s294 + $0x10] sm:$0xff]
        %v433 = vld [vmem:[%s294 + $0x18] sm:$0xff]
        %v434 = vld [vmem:[%s294 + $0x20] sm:$0xff]
        %v435 = vld [vmem:[%s294 + $0x28] sm:$0xff]
        %v436 = vld [vmem:[%s294 + $0x30] sm:$0xff]
        %v437 = vld [vmem:[%s294 + $0x38] sm:$0xff]
        %v438 = vld [vmem:[%s294 + $0x40] sm:$0xff]
        %v439 = vld [vmem:[%s294 + $0x48] sm:$0xff]
        %v440 = vld [vmem:[%s294 + $0x50] sm:$0xff]
        %v441 = vld [vmem:[%s294 + $0x58] sm:$0xff]
        %v442 = vld [vmem:[%s294 + $0x60] sm:$0xff]
        %v443 = vld [vmem:[%s294 + $0x68] sm:$0xff]
        %v444 = vld [vmem:[%s294 + $0x70] sm:$0xff]
        %v445 = vld [vmem:[%s294 + $0x78] sm:$0xff]
        %v446 = vpack.c.bf16 %v431, %v430
        %v447 = vpack.c.bf16 %v433, %v432
        %v448 = vpack.c.bf16 %v435, %v434
        %v449 = vpack.c.bf16 %v437, %v436
        %v450 = vpack.c.bf16 %v439, %v438
        %v451 = vpack.c.bf16 %v441, %v440
        %v452 = vpack.c.bf16 %v443, %v442
        %v453 = vpack.c.bf16 %v445, %v444
        %v454 = vld [vmem:[%s303] sm:$0xff]
        %v455 = vld [vmem:[%s303 + $0x8] sm:$0xff]
        %v456 = vld [vmem:[%s303 + $0x10] sm:$0xff]
        %v457 = vld [vmem:[%s303 + $0x18] sm:$0xff]
        %v458 = vld [vmem:[%s303 + $0x20] sm:$0xff]
        %v459 = vld [vmem:[%s303 + $0x28] sm:$0xff]
        %v460 = vld [vmem:[%s303 + $0x30] sm:$0xff]
        %v461 = vld [vmem:[%s303 + $0x38] sm:$0xff]
        %v462 = vld [vmem:[%s303 + $0x40] sm:$0xff]
        %v463 = vld [vmem:[%s303 + $0x48] sm:$0xff]
        %v464 = vld [vmem:[%s303 + $0x50] sm:$0xff]
        %v465 = vld [vmem:[%s303 + $0x58] sm:$0xff]
        %v466 = vld [vmem:[%s303 + $0x60] sm:$0xff]
        %v467 = vld [vmem:[%s303 + $0x68] sm:$0xff]
        %v468 = vld [vmem:[%s303 + $0x70] sm:$0xff]
        %v469 = vld [vmem:[%s303 + $0x78] sm:$0xff]
        %v486 = vunpack.c.l.b16 %v454
        %v487 = vunpack.c.h.b16 %v454
        %v488 = vunpack.c.l.b16 %v455
        %v489 = vunpack.c.h.b16 %v455
        %v490 = vunpack.c.l.b16 %v456
        %v491 = vunpack.c.h.b16 %v456
        %v492 = vunpack.c.l.b16 %v457
        %v493 = vunpack.c.h.b16 %v457
        %v494 = vunpack.c.l.b16 %v458
        %v495 = vunpack.c.h.b16 %v458
        %v496 = vunpack.c.l.b16 %v459
        %v497 = vunpack.c.h.b16 %v459
        %v498 = vunpack.c.l.b16 %v460
        %v499 = vunpack.c.h.b16 %v460
        %v500 = vunpack.c.l.b16 %v461
        %v501 = vunpack.c.h.b16 %v461
        %v502 = vunpack.c.l.b16 %v462
        %v503 = vunpack.c.h.b16 %v462
        %v504 = vunpack.c.l.b16 %v463
        %v505 = vunpack.c.h.b16 %v463
        %v506 = vunpack.c.l.b16 %v464
        %v507 = vunpack.c.h.b16 %v464
        %v508 = vunpack.c.l.b16 %v465
        %v509 = vunpack.c.h.b16 %v465
        %v510 = vunpack.c.l.b16 %v466
        %v511 = vunpack.c.h.b16 %v466
        %v512 = vunpack.c.l.b16 %v467
        %v513 = vunpack.c.h.b16 %v467
        %v514 = vunpack.c.l.b16 %v468
        %v515 = vunpack.c.h.b16 %v468
        %v516 = vunpack.c.l.b16 %v469
        %v517 = vunpack.c.h.b16 %v469
        %v518 = vpack.c.b16 %v488, %v486
        %v519 = vpack.c.b16 %v489, %v487
        %v520 = vpack.c.b16 %v492, %v490
        %v521 = vpack.c.b16 %v493, %v491
        %v522 = vpack.c.b16 %v496, %v494
        %v523 = vpack.c.b16 %v497, %v495
        %v524 = vpack.c.b16 %v500, %v498
        %v525 = vpack.c.b16 %v501, %v499
        %v526 = vpack.c.b16 %v504, %v502
        %v527 = vpack.c.b16 %v505, %v503
        %v528 = vpack.c.b16 %v508, %v506
        %v529 = vpack.c.b16 %v509, %v507
        %v530 = vpack.c.b16 %v512, %v510
        %v531 = vpack.c.b16 %v513, %v511
        %v532 = vpack.c.b16 %v516, %v514
        %v533 = vpack.c.b16 %v517, %v515
        %550 = vmatprep.subr.bf16.mxu0 %v519
        %551 = vmatpush1.bf16.msra.mxu0 %v518
        %552 = vmatprep.subr.bf16.mxu0 %v521
        %553 = vmatpush1.bf16.msra.mxu0 %v520
        %554 = vmatprep.subr.bf16.mxu0 %v523
        %555 = vmatpush1.bf16.msra.mxu0 %v522
        %556 = vmatprep.subr.bf16.mxu0 %v525
        %557 = vmatpush1.bf16.msra.mxu0 %v524
        %558 = vmatprep.subr.bf16.mxu0 %v527
        %559 = vmatpush1.bf16.msra.mxu0 %v526
        %560 = vmatprep.subr.bf16.mxu0 %v529
        %561 = vmatpush1.bf16.msra.mxu0 %v528
        %562 = vmatprep.subr.bf16.mxu0 %v531
        %563 = vmatpush1.bf16.msra.mxu0 %v530
        %564 = vmatprep.subr.bf16.mxu0 %v533
        %565 = vmatpush1.bf16.msra.mxu0 %v532
        %566 = vmatprep.subr.bf16.mxu0 0
        %567 = vmatpush1.bf16.msra.mxu0 0
        %568 = vmatprep.subr.bf16.mxu0 0
        %569 = vmatpush1.bf16.msra.mxu0 0
        %570 = vmatprep.subr.bf16.mxu0 0
        %571 = vmatpush1.bf16.msra.mxu0 0
        %572 = vmatprep.subr.bf16.mxu0 0
        %573 = vmatpush1.bf16.msra.mxu0 0
        %574 = vmatprep.subr.bf16.mxu0 0
        %575 = vmatpush1.bf16.msra.mxu0 0
        %576 = vmatprep.subr.bf16.mxu0 0
        %577 = vmatpush1.bf16.msra.mxu0 0
        %578 = vmatprep.subr.bf16.mxu0 0
        %579 = vmatpush1.bf16.msra.mxu0 0
        %580 = vmatprep.subr.bf16.mxu0 0
        %581 = vmatpush1.bf16.msra.mxu0 0
        %582 = vmatprep.mubr.bf16.mxu0 0
        %583 = vmatmul.mubr.bf16.gmra.mrb[0].mxu0 %v446
        %v584 = vpop.f32.mrb[0].mxu0
        %v585 = vadd.f32 0.0, %v584
        %v586 = vpop.f32.mrb[0].mxu0
        %v587 = vadd.f32 0.0, %v586
        %v588 = vpop.f32.mrb[0].mxu0
        %v589 = vadd.f32 0.0, %v588
        %v590 = vpop.f32.mrb[0].mxu0
        %v591 = vadd.f32 0.0, %v590
        %592 = vmatprep.mubr.bf16.mxu0 0
        %593 = vmatmul.mubr.bf16.gmra.mrb[0].mxu0 %v447
        %v594 = vpop.f32.mrb[0].mxu0
        %v595 = vadd.f32 0.0, %v594
        %v596 = vpop.f32.mrb[0].mxu0
        %v597 = vadd.f32 0.0, %v596
        %v598 = vpop.f32.mrb[0].mxu0
        %v599 = vadd.f32 0.0, %v598
        %v600 = vpop.f32.mrb[0].mxu0
        %v601 = vadd.f32 0.0, %v600
        %602 = vmatprep.mubr.bf16.mxu0 0
        %603 = vmatmul.mubr.bf16.gmra.mrb[0].mxu0 %v448
        %v604 = vpop.f32.mrb[0].mxu0
        %v605 = vadd.f32 0.0, %v604
        %v606 = vpop.f32.mrb[0].mxu0
        %v607 = vadd.f32 0.0, %v606
        %v608 = vpop.f32.mrb[0].mxu0
        %v609 = vadd.f32 0.0, %v608
        %v610 = vpop.f32.mrb[0].mxu0
        %v611 = vadd.f32 0.0, %v610
        %612 = vmatprep.mubr.bf16.mxu0 0
        %613 = vmatmul.mubr.bf16.gmra.mrb[0].mxu0 %v449
        %v614 = vpop.f32.mrb[0].mxu0
        %v615 = vadd.f32 0.0, %v614
        %v616 = vpop.f32.mrb[0].mxu0
        %v617 = vadd.f32 0.0, %v616
        %v618 = vpop.f32.mrb[0].mxu0
        %v619 = vadd.f32 0.0, %v618
        %v620 = vpop.f32.mrb[0].mxu0
        %v621 = vadd.f32 0.0, %v620
        %622 = vmatprep.mubr.bf16.mxu0 0
        %623 = vmatmul.mubr.bf16.gmra.mrb[0].mxu0 %v450
        %v624 = vpop.f32.mrb[0].mxu0
        %v625 = vadd.f32 0.0, %v624
        %v626 = vpop.f32.mrb[0].mxu0
        %v627 = vadd.f32 0.0, %v626
        %v628 = vpop.f32.mrb[0].mxu0
        %v629 = vadd.f32 0.0, %v628
        %v630 = vpop.f32.mrb[0].mxu0
        %v631 = vadd.f32 0.0, %v630
        %632 = vmatprep.mubr.bf16.mxu0 0
        %633 = vmatmul.mubr.bf16.gmra.mrb[0].mxu0 %v451
        %v634 = vpop.f32.mrb[0].mxu0
        %v635 = vadd.f32 0.0, %v634
        %v636 = vpop.f32.mrb[0].mxu0
        %v637 = vadd.f32 0.0, %v636
        %v638 = vpop.f32.mrb[0].mxu0
        %v639 = vadd.f32 0.0, %v638
        %v640 = vpop.f32.mrb[0].mxu0
        %v641 = vadd.f32 0.0, %v640
        %642 = vmatprep.mubr.bf16.mxu0 0
        %643 = vmatmul.mubr.bf16.gmra.mrb[0].mxu0 %v452
        %v644 = vpop.f32.mrb[0].mxu0
        %v645 = vadd.f32 0.0, %v644
        %v646 = vpop.f32.mrb[0].mxu0
        %v647 = vadd.f32 0.0, %v646
        %v648 = vpop.f32.mrb[0].mxu0
        %v649 = vadd.f32 0.0, %v648
        %v650 = vpop.f32.mrb[0].mxu0
        %v651 = vadd.f32 0.0, %v650
        %652 = vmatprep.mubr.bf16.mxu0 0
        %653 = vmatmul.mubr.bf16.gmra.mrb[0].mxu0 %v453
        %v654 = vpop.f32.mrb[0].mxu0
        %v655 = vadd.f32 0.0, %v654
        %v656 = vpop.f32.mrb[0].mxu0
        %v657 = vadd.f32 0.0, %v656
        %v658 = vpop.f32.mrb[0].mxu0
        %v659 = vadd.f32 0.0, %v658
        %v660 = vpop.f32.mrb[0].mxu0
        %v661 = vadd.f32 0.0, %v660
        %662 = vdwg.mxu0
        %v663 = vadd.f32 %v398, %v585
        %v664 = vadd.f32 %v399, %v587
        %v665 = vadd.f32 %v400, %v589
        %v666 = vadd.f32 %v401, %v591
        %v667 = vadd.f32 %v402, %v595
        %v668 = vadd.f32 %v403, %v597
        %v669 = vadd.f32 %v404, %v599
        %v670 = vadd.f32 %v405, %v601
        %v671 = vadd.f32 %v406, %v605
        %v672 = vadd.f32 %v407, %v607
        %v673 = vadd.f32 %v408, %v609
        %v674 = vadd.f32 %v409, %v611
        %v675 = vadd.f32 %v410, %v615
        %v676 = vadd.f32 %v411, %v617
        %v677 = vadd.f32 %v412, %v619
        %v678 = vadd.f32 %v413, %v621
        %v679 = vadd.f32 %v414, %v625
        %v680 = vadd.f32 %v415, %v627
        %v681 = vadd.f32 %v416, %v629
        %v682 = vadd.f32 %v417, %v631
        %v683 = vadd.f32 %v418, %v635
        %v684 = vadd.f32 %v419, %v637
        %v685 = vadd.f32 %v420, %v639
        %v686 = vadd.f32 %v421, %v641
        %v687 = vadd.f32 %v422, %v645
        %v688 = vadd.f32 %v423, %v647
        %v689 = vadd.f32 %v424, %v649
        %v690 = vadd.f32 %v425, %v651
        %v691 = vadd.f32 %v426, %v655
        %v692 = vadd.f32 %v427, %v657
        %v693 = vadd.f32 %v428, %v659
        %v694 = vadd.f32 %v429, %v661
        %695 = vst [vmem:[#allocation2] sm:$0xff] %v663
        %696 = vst [vmem:[#allocation2 + $0x8] sm:$0xff] %v664
        %697 = vst [vmem:[#allocation2 + $0x10] sm:$0xff] %v665
        %698 = vst [vmem:[#allocation2 + $0x18] sm:$0xff] %v666
        %699 = vst [vmem:[#allocation2 + $0x20] sm:$0xff] %v667
        %700 = vst [vmem:[#allocation2 + $0x28] sm:$0xff] %v668
        %701 = vst [vmem:[#allocation2 + $0x30] sm:$0xff] %v669
        %702 = vst [vmem:[#allocation2 + $0x38] sm:$0xff] %v670
        %703 = vst [vmem:[#allocation2 + $0x40] sm:$0xff] %v671
        %704 = vst [vmem:[#allocation2 + $0x48] sm:$0xff] %v672
        %705 = vst [vmem:[#allocation2 + $0x50] sm:$0xff] %v673
        %706 = vst [vmem:[#allocation2 + $0x58] sm:$0xff] %v674
        %707 = vst [vmem:[#allocation2 + $0x60] sm:$0xff] %v675
        %708 = vst [vmem:[#allocation2 + $0x68] sm:$0xff] %v676
        %709 = vst [vmem:[#allocation2 + $0x70] sm:$0xff] %v677
        %710 = vst [vmem:[#allocation2 + $0x78] sm:$0xff] %v678
        %711 = vst [vmem:[#allocation2 + $0x80] sm:$0xff] %v679
        %712 = vst [vmem:[#allocation2 + $0x88] sm:$0xff] %v680
        %713 = vst [vmem:[#allocation2 + $0x90] sm:$0xff] %v681
        %714 = vst [vmem:[#allocation2 + $0x98] sm:$0xff] %v682
        %715 = vst [vmem:[#allocation2 + $0xa0] sm:$0xff] %v683
        %716 = vst [vmem:[#allocation2 + $0xa8] sm:$0xff] %v684
        %717 = vst [vmem:[#allocation2 + $0xb0] sm:$0xff] %v685
        %718 = vst [vmem:[#allocation2 + $0xb8] sm:$0xff] %v686
        %719 = vst [vmem:[#allocation2 + $0xc0] sm:$0xff] %v687
        %720 = vst [vmem:[#allocation2 + $0xc8] sm:$0xff] %v688
        %721 = vst [vmem:[#allocation2 + $0xd0] sm:$0xff] %v689
        %722 = vst [vmem:[#allocation2 + $0xd8] sm:$0xff] %v690
        %723 = vst [vmem:[#allocation2 + $0xe0] sm:$0xff] %v691
        %724 = vst [vmem:[#allocation2 + $0xe8] sm:$0xff] %v692
        %725 = vst [vmem:[#allocation2 + $0xf0] sm:$0xff] %v693
        %726 = vst [vmem:[#allocation2 + $0xf8] sm:$0xff] %v694
        %p727 = scmp.eq.s32.totalorder %s36, 4
        // Predicated region
        $region45: #{tpu_custom_call.1} parent=31 // pred_check
          %p728 = pneg %p727
        $region46: #{tpu_custom_call.1} parent=31 // pred_check_branch
          %730 = sbr.rel (%p728) target = $region48
        $region47: #{tpu_custom_call.1} parent=31 // pred_region
          %v731 = vld [vmem:[#allocation2] sm:$0xff]
          %v732 = vld [vmem:[#allocation2 + $0x8] sm:$0xff]
          %v733 = vld [vmem:[#allocation2 + $0x10] sm:$0xff]
          %v734 = vld [vmem:[#allocation2 + $0x18] sm:$0xff]
          %v735 = vld [vmem:[#allocation2 + $0x20] sm:$0xff]
          %v736 = vld [vmem:[#allocation2 + $0x28] sm:$0xff]
          %v737 = vld [vmem:[#allocation2 + $0x30] sm:$0xff]
          %v738 = vld [vmem:[#allocation2 + $0x38] sm:$0xff]
          %v739 = vld [vmem:[#allocation2 + $0x40] sm:$0xff]
          %v740 = vld [vmem:[#allocation2 + $0x48] sm:$0xff]
          %v741 = vld [vmem:[#allocation2 + $0x50] sm:$0xff]
          %v742 = vld [vmem:[#allocation2 + $0x58] sm:$0xff]
          %v743 = vld [vmem:[#allocation2 + $0x60] sm:$0xff]
          %v744 = vld [vmem:[#allocation2 + $0x68] sm:$0xff]
          %v745 = vld [vmem:[#allocation2 + $0x70] sm:$0xff]
          %v746 = vld [vmem:[#allocation2 + $0x78] sm:$0xff]
          %v747 = vld [vmem:[#allocation2 + $0x80] sm:$0xff]
          %v748 = vld [vmem:[#allocation2 + $0x88] sm:$0xff]
          %v749 = vld [vmem:[#allocation2 + $0x90] sm:$0xff]
          %v750 = vld [vmem:[#allocation2 + $0x98] sm:$0xff]
          %v751 = vld [vmem:[#allocation2 + $0xa0] sm:$0xff]
          %v752 = vld [vmem:[#allocation2 + $0xa8] sm:$0xff]
          %v753 = vld [vmem:[#allocation2 + $0xb0] sm:$0xff]
          %v754 = vld [vmem:[#allocation2 + $0xb8] sm:$0xff]
          %v755 = vld [vmem:[#allocation2 + $0xc0] sm:$0xff]
          %v756 = vld [vmem:[#allocation2 + $0xc8] sm:$0xff]
          %v757 = vld [vmem:[#allocation2 + $0xd0] sm:$0xff]
          %v758 = vld [vmem:[#allocation2 + $0xd8] sm:$0xff]
          %v759 = vld [vmem:[#allocation2 + $0xe0] sm:$0xff]
          %v760 = vld [vmem:[#allocation2 + $0xe8] sm:$0xff]
          %v761 = vld [vmem:[#allocation2 + $0xf0] sm:$0xff]
          %v762 = vld [vmem:[#allocation2 + $0xf8] sm:$0xff]
          %v763 = vld [vmem:[%s355] sm:$0x3]
          %v765 = vlaneseq
          %v766 = vshrl.u32 %v765, 7
          %v767 = vsub.s32 0, %v766
          %v768 = vrot.slane %v763, %v767
          %v769 = vlaneseq
          %v770 = vshrl.u32 %v769, 7
          %v771 = vsub.s32 1, %v770
          %v772 = vrot.slane %v763, %v771
          %v775 = vadd.f32 %v731, %v768
          %v776 = vadd.f32 %v732, %v772
          %v777 = vadd.f32 %v733, %v768
          %v778 = vadd.f32 %v734, %v772
          %v779 = vadd.f32 %v735, %v768
          %v780 = vadd.f32 %v736, %v772
          %v781 = vadd.f32 %v737, %v768
          %v782 = vadd.f32 %v738, %v772
          %v783 = vadd.f32 %v739, %v768
          %v784 = vadd.f32 %v740, %v772
          %v785 = vadd.f32 %v741, %v768
          %v786 = vadd.f32 %v742, %v772
          %v787 = vadd.f32 %v743, %v768
          %v788 = vadd.f32 %v744, %v772
          %v789 = vadd.f32 %v745, %v768
          %v790 = vadd.f32 %v746, %v772
          %v791 = vadd.f32 %v747, %v768
          %v792 = vadd.f32 %v748, %v772
          %v793 = vadd.f32 %v749, %v768
          %v794 = vadd.f32 %v750, %v772
          %v795 = vadd.f32 %v751, %v768
          %v796 = vadd.f32 %v752, %v772
          %v797 = vadd.f32 %v753, %v768
          %v798 = vadd.f32 %v754, %v772
          %v799 = vadd.f32 %v755, %v768
          %v800 = vadd.f32 %v756, %v772
          %v801 = vadd.f32 %v757, %v768
          %v802 = vadd.f32 %v758, %v772
          %v803 = vadd.f32 %v759, %v768
          %v804 = vadd.f32 %v760, %v772
          %v805 = vadd.f32 %v761, %v768
          %v806 = vadd.f32 %v762, %v772
          %v807 = vpack.c.bf16 %v777, %v775
          %v808 = vpack.c.bf16 %v778, %v776
          %v809 = vpack.c.bf16 %v781, %v779
          %v810 = vpack.c.bf16 %v782, %v780
          %v811 = vpack.c.bf16 %v785, %v783
          %v812 = vpack.c.bf16 %v786, %v784
          %v813 = vpack.c.bf16 %v789, %v787
          %v814 = vpack.c.bf16 %v790, %v788
          %v815 = vpack.c.bf16 %v793, %v791
          %v816 = vpack.c.bf16 %v794, %v792
          %v817 = vpack.c.bf16 %v797, %v795
          %v818 = vpack.c.bf16 %v798, %v796
          %v819 = vpack.c.bf16 %v801, %v799
          %v820 = vpack.c.bf16 %v802, %v800
          %v821 = vpack.c.bf16 %v805, %v803
          %v822 = vpack.c.bf16 %v806, %v804
          %v839 = vunpack.c.l.b16 %v807
          %v840 = vunpack.c.l.b16 %v808
          %v841 = vunpack.c.h.b16 %v807
          %v842 = vunpack.c.h.b16 %v808
          %v843 = vunpack.c.l.b16 %v809
          %v844 = vunpack.c.l.b16 %v810
          %v845 = vunpack.c.h.b16 %v809
          %v846 = vunpack.c.h.b16 %v810
          %v847 = vunpack.c.l.b16 %v811
          %v848 = vunpack.c.l.b16 %v812
          %v849 = vunpack.c.h.b16 %v811
          %v850 = vunpack.c.h.b16 %v812
          %v851 = vunpack.c.l.b16 %v813
          %v852 = vunpack.c.l.b16 %v814
          %v853 = vunpack.c.h.b16 %v813
          %v854 = vunpack.c.h.b16 %v814
          %v855 = vunpack.c.l.b16 %v815
          %v856 = vunpack.c.l.b16 %v816
          %v857 = vunpack.c.h.b16 %v815
          %v858 = vunpack.c.h.b16 %v816
          %v859 = vunpack.c.l.b16 %v817
          %v860 = vunpack.c.l.b16 %v818
          %v861 = vunpack.c.h.b16 %v817
          %v862 = vunpack.c.h.b16 %v818
          %v863 = vunpack.c.l.b16 %v819
          %v864 = vunpack.c.l.b16 %v820
          %v865 = vunpack.c.h.b16 %v819
          %v866 = vunpack.c.h.b16 %v820
          %v867 = vunpack.c.l.b16 %v821
          %v868 = vunpack.c.l.b16 %v822
          %v869 = vunpack.c.h.b16 %v821
          %v870 = vunpack.c.h.b16 %v822
          %v871 = vpack.c.b16 %v840, %v839
          %v872 = vpack.c.b16 %v842, %v841
          %v873 = vpack.c.b16 %v844, %v843
          %v874 = vpack.c.b16 %v846, %v845
          %v875 = vpack.c.b16 %v848, %v847
          %v876 = vpack.c.b16 %v850, %v849
          %v877 = vpack.c.b16 %v852, %v851
          %v878 = vpack.c.b16 %v854, %v853
          %v879 = vpack.c.b16 %v856, %v855
          %v880 = vpack.c.b16 %v858, %v857
          %v881 = vpack.c.b16 %v860, %v859
          %v882 = vpack.c.b16 %v862, %v861
          %v883 = vpack.c.b16 %v864, %v863
          %v884 = vpack.c.b16 %v866, %v865
          %v885 = vpack.c.b16 %v868, %v867
          %v886 = vpack.c.b16 %v870, %v869
          %903 = vst [vmem:[%s334] sm:$0xff] %v871
          %904 = vst [vmem:[%s334 + $0x8] sm:$0xff] %v872
          %905 = vst [vmem:[%s334 + $0x10] sm:$0xff] %v873
          %906 = vst [vmem:[%s334 + $0x18] sm:$0xff] %v874
          %907 = vst [vmem:[%s334 + $0x20] sm:$0xff] %v875
          %908 = vst [vmem:[%s334 + $0x28] sm:$0xff] %v876
          %909 = vst [vmem:[%s334 + $0x30] sm:$0xff] %v877
          %910 = vst [vmem:[%s334 + $0x38] sm:$0xff] %v878
          %911 = vst [vmem:[%s334 + $0x40] sm:$0xff] %v879
          %912 = vst [vmem:[%s334 + $0x48] sm:$0xff] %v880
          %913 = vst [vmem:[%s334 + $0x50] sm:$0xff] %v881
          %914 = vst [vmem:[%s334 + $0x58] sm:$0xff] %v882
          %915 = vst [vmem:[%s334 + $0x60] sm:$0xff] %v883
          %916 = vst [vmem:[%s334 + $0x68] sm:$0xff] %v884
          %917 = vst [vmem:[%s334 + $0x70] sm:$0xff] %v885
          %918 = vst [vmem:[%s334 + $0x78] sm:$0xff] %v886
          %v919 = vadd.f32 %v775, %v777
          %v920 = vadd.f32 %v919, %v779
          %v921 = vadd.f32 %v920, %v781
          %v922 = vadd.f32 %v921, %v783
          %v923 = vadd.f32 %v922, %v785
          %v924 = vadd.f32 %v923, %v787
          %v925 = vadd.f32 %v924, %v789
          %v926 = vadd.f32 %v925, %v791
          %v927 = vadd.f32 %v926, %v793
          %v928 = vadd.f32 %v927, %v795
          %v929 = vadd.f32 %v928, %v797
          %v930 = vadd.f32 %v929, %v799
          %v931 = vadd.f32 %v930, %v801
          %v932 = vadd.f32 %v931, %v803
          %v933 = vadd.f32 %v932, %v805
          %v934 = vrot.slane %v933, 4
          %v935 = vadd.f32 %v933, %v934
          %v936 = vrot.slane %v935, 2
          %v937 = vadd.f32 %v935, %v936
          %v938 = vrot.slane %v937, 1
          %v939 = vadd.f32 %v937, %v938
          %v940 = vadd.f32 %v776, %v778
          %v941 = vadd.f32 %v940, %v780
          %v942 = vadd.f32 %v941, %v782
          %v943 = vadd.f32 %v942, %v784
          %v944 = vadd.f32 %v943, %v786
          %v945 = vadd.f32 %v944, %v788
          %v946 = vadd.f32 %v945, %v790
          %v947 = vadd.f32 %v946, %v792
          %v948 = vadd.f32 %v947, %v794
          %v949 = vadd.f32 %v948, %v796
          %v950 = vadd.f32 %v949, %v798
          %v951 = vadd.f32 %v950, %v800
          %v952 = vadd.f32 %v951, %v802
          %v953 = vadd.f32 %v952, %v804
          %v954 = vadd.f32 %v953, %v806
          %v955 = vrot.slane %v954, 4
          %v956 = vadd.f32 %v954, %v955
          %v957 = vrot.slane %v956, 2
          %v958 = vadd.f32 %v956, %v957
          %v959 = vrot.slane %v958, 1
          %v960 = vadd.f32 %v958, %v959
          %v961 = vmul.f32 %v775, %v775
          %v962 = vmul.f32 %v776, %v776
          %v963 = vmul.f32 %v777, %v777
          %v964 = vmul.f32 %v778, %v778
          %v965 = vmul.f32 %v779, %v779
          %v966 = vmul.f32 %v780, %v780
          %v967 = vmul.f32 %v781, %v781
          %v968 = vmul.f32 %v782, %v782
          %v969 = vmul.f32 %v783, %v783
          %v970 = vmul.f32 %v784, %v784
          %v971 = vmul.f32 %v785, %v785
          %v972 = vmul.f32 %v786, %v786
          %v973 = vmul.f32 %v787, %v787
          %v974 = vmul.f32 %v788, %v788
          %v975 = vmul.f32 %v789, %v789
          %v976 = vmul.f32 %v790, %v790
          %v977 = vmul.f32 %v791, %v791
          %v978 = vmul.f32 %v792, %v792
          %v979 = vmul.f32 %v793, %v793
          %v980 = vmul.f32 %v794, %v794
          %v981 = vmul.f32 %v795, %v795
          %v982 = vmul.f32 %v796, %v796
          %v983 = vmul.f32 %v797, %v797
          %v984 = vmul.f32 %v798, %v798
          %v985 = vmul.f32 %v799, %v799
          %v986 = vmul.f32 %v800, %v800
          %v987 = vmul.f32 %v801, %v801
          %v988 = vmul.f32 %v802, %v802
          %v989 = vmul.f32 %v803, %v803
          %v990 = vmul.f32 %v804, %v804
          %v991 = vmul.f32 %v805, %v805
          %v992 = vmul.f32 %v806, %v806
          %v993 = vadd.f32 %v961, %v963
          %v994 = vadd.f32 %v993, %v965
          %v995 = vadd.f32 %v994, %v967
          %v996 = vadd.f32 %v995, %v969
          %v997 = vadd.f32 %v996, %v971
          %v998 = vadd.f32 %v997, %v973
          %v999 = vadd.f32 %v998, %v975
          %v1000 = vadd.f32 %v999, %v977
          %v1001 = vadd.f32 %v1000, %v979
          %v1002 = vadd.f32 %v1001, %v981
          %v1003 = vadd.f32 %v1002, %v983
          %v1004 = vadd.f32 %v1003, %v985
          %v1005 = vadd.f32 %v1004, %v987
          %v1006 = vadd.f32 %v1005, %v989
          %v1007 = vadd.f32 %v1006, %v991
          %v1008 = vrot.slane %v1007, 4
          %v1009 = vadd.f32 %v1007, %v1008
          %v1010 = vrot.slane %v1009, 2
          %v1011 = vadd.f32 %v1009, %v1010
          %v1012 = vrot.slane %v1011, 1
          %v1013 = vadd.f32 %v1011, %v1012
          %v1014 = vadd.f32 %v962, %v964
          %v1015 = vadd.f32 %v1014, %v966
          %v1016 = vadd.f32 %v1015, %v968
          %v1017 = vadd.f32 %v1016, %v970
          %v1018 = vadd.f32 %v1017, %v972
          %v1019 = vadd.f32 %v1018, %v974
          %v1020 = vadd.f32 %v1019, %v976
          %v1021 = vadd.f32 %v1020, %v978
          %v1022 = vadd.f32 %v1021, %v980
          %v1023 = vadd.f32 %v1022, %v982
          %v1024 = vadd.f32 %v1023, %v984
          %v1025 = vadd.f32 %v1024, %v986
          %v1026 = vadd.f32 %v1025, %v988
          %v1027 = vadd.f32 %v1026, %v990
          %v1028 = vadd.f32 %v1027, %v992
          %v1029 = vrot.slane %v1028, 4
          %v1030 = vadd.f32 %v1028, %v1029
          %v1031 = vrot.slane %v1030, 2
          %v1032 = vadd.f32 %v1030, %v1031
          %v1033 = vrot.slane %v1032, 1
          %v1034 = vadd.f32 %v1032, %v1033
          %v1037 = vcombine.low %v939, %v960
          %v1039 = vunpack.c.l.s4 1966171168
          %v1040 = vunpack.c.0.s8 %v1039
          %v1041 = vlaneseq
          %v1042 = vshrl.u32 %v1041, 7
          %v1043 = vsub.s32 %v1040, %v1042
          %v1044 = vrot.slane %v1037, %v1043
          %v1046 = vunpack.c.l.s4 1966171168
          %v1047 = vunpack.c.0.s8 %v1046
          %v1048 = vlaneseq
          %v1049 = vshrl.u32 %v1048, 7
          %v1050 = vsub.s32 %v1047, %v1049
          %v1051 = vrot.slane %v1044, %v1050
          %v1053 = vlaneseq
          %vm1054 = vcmp.ge.s32.totalorder %v1053, 0
          %vm1055 = vcmp.lt.s32.totalorder %v1053, 256
          %vm1056 = vmand %vm1054, %vm1055
          %1057 = vst.msk [vmem:[%s341] sm:$0x3] %vm1056, %v1051
          %v1060 = vcombine.low %v1013, %v1034
          %v1062 = vunpack.c.l.s4 1966171168
          %v1063 = vunpack.c.0.s8 %v1062
          %v1064 = vlaneseq
          %v1065 = vshrl.u32 %v1064, 7
          %v1066 = vsub.s32 %v1063, %v1065
          %v1067 = vrot.slane %v1060, %v1066
          %v1069 = vunpack.c.l.s4 1966171168
          %v1070 = vunpack.c.0.s8 %v1069
          %v1071 = vlaneseq
          %v1072 = vshrl.u32 %v1071, 7
          %v1073 = vsub.s32 %v1070, %v1072
          %v1074 = vrot.slane %v1067, %v1073
          %1076 = vst.msk [vmem:[%s348] sm:$0x3] %vm1056, %v1074
        $region48: #{tpu_custom_call.1} parent=31 // pred_fallthru
          _
        %s1077 = sand.u32 %s140, 1
        %s1078 = scalar_lea.sflag [#allocation5], %s1077
        %s1079 = sand.u32 %s140, 1
        %s1080 = smul.addr %s1079, 128
        %s1081 = scalar_lea.vmem [#allocation8], %s1080
        %s1082 = sand.u32 %s29, 1
        %s1083 = scalar_lea.sflag [#allocation10], %s1082
        %s1084 = sand.u32 %s168, 1
        %s1085 = smul.addr %s1084, 2
        %s1086 = scalar_lea.vmem [#allocation9], %s1085
        %s1087 = sand.u32 %s29, 1
        %s1088 = scalar_lea.sflag [#allocation10], %s1087
        %s1089 = sand.u32 %s196, 1
        %s1090 = smul.addr %s1089, 2
        %s1091 = scalar_lea.vmem [#allocation11], %s1090
        // Predicated region
        $region49: #{tpu_custom_call.1} parent=31 // pred_check
          %p1092 = pneg %p150
        $region50: #{tpu_custom_call.1} parent=31 // pred_check_branch
          %1094 = sbr.rel (%p1092) target = $region52
        $region51: #{tpu_custom_call.1} parent=31 // pred_region
          %s1095 = smul.u32 16, %s34
          %s1096 = smul.u32 2, %s35
          %s1098 = ssub.s32 2048, 2048
          %1099 = vsyncadd %s1078, %s1098
          %s1100 = smul.addr %s1095, 2
          %s1101 = sadd.s32 %s1096, %s1100
          %s1102 = smul.addr %s1101, 64
          %s1103 = scalar_lea.hbm %s3, %s1102
          %s1104 = sshll.u32 %s1081, 4
          %s1105 = int_to_ptr.vmem [resolvable:$true] %s1104
          %1110 = dma.vmem_to_hbm [thread:$0]  %s1105, 2048, %s1103, %s1078, 128, 128, 8
        $region52: #{tpu_custom_call.1} parent=31 // pred_fallthru
          _
        // Predicated region
        $region53: #{tpu_custom_call.1} parent=31 // pred_check
          %p1111 = pneg %p178
        $region54: #{tpu_custom_call.1} parent=31 // pred_check_branch
          %1113 = sbr.rel (%p1111) target = $region56
        $region55: #{tpu_custom_call.1} parent=31 // pred_region
          %s1114 = smul.u32 2, %s35
          %s1116 = ssub.s32 32, 32
          %1117 = vsyncadd %s1083, %s1116
          %s1118 = smul.addr %s34, 2
          %s1119 = sadd.s32 %s1114, %s1118
          %s1120 = smul.addr %s1119, 16
          %s1121 = scalar_lea.hbm %s4, %s1120
          %s1123 = sshll.u32 %s1086, 4
          %s1124 = int_to_ptr.vmem [resolvable:$true] %s1123
          %1126 = dma.vmem_to_hbm [thread:$0]  %s1124, 32, %s1121, %s1083
        $region56: #{tpu_custom_call.1} parent=31 // pred_fallthru
          _
        // Predicated region
        $region57: #{tpu_custom_call.1} parent=31 // pred_check
          %p1127 = pneg %p206
        $region58: #{tpu_custom_call.1} parent=31 // pred_check_branch
          %1129 = sbr.rel (%p1127) target = $region60
        $region59: #{tpu_custom_call.1} parent=31 // pred_region
          %s1130 = smul.u32 2, %s35
          %s1132 = ssub.s32 32, 32
          %1133 = vsyncadd %s1088, %s1132
          %s1134 = smul.addr %s34, 2
          %s1135 = sadd.s32 %s1130, %s1134
          %s1136 = smul.addr %s1135, 16
          %s1137 = scalar_lea.hbm %s5, %s1136
          %s1139 = sshll.u32 %s1091, 4
          %s1140 = int_to_ptr.vmem [resolvable:$true] %s1139
          %1142 = dma.vmem_to_hbm [thread:$0]  %s1140, 32, %s1137, %s1088
        $region60: #{tpu_custom_call.1} parent=31 // pred_fallthru
          _
      $region32: #{tpu_custom_call.1} parent=5 // pred_fallthru
        _
      %p1143 = scmp.le.s32.totalorder 2, %s24
      // Predicated region
      $region61: #{tpu_custom_call.1} parent=5 // pred_check
        %p1144 = pneg %p1143
      $region62: #{tpu_custom_call.1} parent=5 // pred_check_branch
        %1146 = sbr.rel (%p1144) target = $region64
      $region63: #{tpu_custom_call.1} parent=5 // pred_region
        %s1147 = ssub.s32 %s24, 2
        // Predicated region
        $region65: #{tpu_custom_call.1} parent=63 // pred_check
          %p1148 = pneg %p156
        $region66: #{tpu_custom_call.1} parent=63 // pred_check_branch
          %1150 = sbr.rel (%p1148) target = $region68
        $region67: #{tpu_custom_call.1} parent=63 // pred_region
          %s1151 = sand.u32 %s141, 1
          %s1152 = scalar_lea.sflag [#allocation5], %s1151
          %s1153 = sand.u32 %s141, 1
          %s1154 = smul.addr %s1153, 128
          %s1155 = scalar_lea.vmem [#allocation8], %s1154
          %1156 = dma.done %s1152, 2048
        $region68: #{tpu_custom_call.1} parent=63 // pred_fallthru
          _
        // Predicated region
        $region69: #{tpu_custom_call.1} parent=63 // pred_check
          %p1157 = pneg %p184
        $region70: #{tpu_custom_call.1} parent=63 // pred_check_branch
          %1159 = sbr.rel (%p1157) target = $region72
        $region71: #{tpu_custom_call.1} parent=63 // pred_region
          %s1160 = sand.u32 %s30, 1
          %s1161 = scalar_lea.sflag [#allocation10], %s1160
          %s1162 = sand.u32 %s169, 1
          %s1163 = smul.addr %s1162, 2
          %s1164 = scalar_lea.vmem [#allocation9], %s1163
          %1165 = dma.done %s1161, 32
        $region72: #{tpu_custom_call.1} parent=63 // pred_fallthru
          _
        // Predicated region
        $region73: #{tpu_custom_call.1} parent=63 // pred_check
          %p1166 = pneg %p212
        $region74: #{tpu_custom_call.1} parent=63 // pred_check_branch
          %1168 = sbr.rel (%p1166) target = $region76
        $region75: #{tpu_custom_call.1} parent=63 // pred_region
          %s1169 = sand.u32 %s30, 1
          %s1170 = scalar_lea.sflag [#allocation10], %s1169
          %s1171 = sand.u32 %s197, 1
          %s1172 = smul.addr %s1171, 2
          %s1173 = scalar_lea.vmem [#allocation11], %s1172
          %1174 = dma.done %s1170, 32
        $region76: #{tpu_custom_call.1} parent=63 // pred_fallthru
          _
      $region64: #{tpu_custom_call.1} parent=5 // pred_fallthru
        _
    $region6: #{tpu_custom_call.1} parent=1 // loop_footer
      %s28 = sadd.s32 1, %s24
    $region7: #{tpu_custom_call.1} parent=1 // loop_footer_branch
      %23 = sbr.rel target = $region3
    $region8: #{tpu_custom_call.1} parent=1 // loop_exit
      _
    %1175 = vsyncpa [#allocation4], 1
    %s1176 = scalar_lea.sflag [#allocation4], 1
    %1177 = vsyncpa %s1176, 1
    %1178 = vsyncpa [#allocation7], 1
    %s1179 = scalar_lea.sflag [#allocation7], 1
    %1180 = vsyncpa %s1179, 1
    %1181 = vsyncpa [#allocation5], 1
    %s1182 = scalar_lea.sflag [#allocation5], 1
    %1183 = vsyncpa %s1182, 1
    %1184 = vsyncpa [#allocation10], 1
    %s1185 = scalar_lea.sflag [#allocation10], 1
    %1186 = vsyncpa %s1185, 1

</llo_original>
